<compile_context>
chip_gen: v7x
topology: tpu7x:2x2x1
jax: 0.10.0
libtpu: 0.0.40
codegen_flags: <defaults>
</compile_context>

<pallas_src>
import functools

import jax
import jax.numpy as jnp
from jax.experimental import pallas as pl
from jax.experimental.pallas import tpu as pltpu

F_IN, F_H1, F_H2, F_OUT = 2, 15, 5, 2        # layer widths of TinyModel
_PALLAS_MIN_BATCH = 1024                     # below this, plain fused XLA wins


def _round_up(x, m):
    return (x + m - 1) // m * m


def tiny_mlp_kernel(xT_ref, w1_ref, b1_ref, w2_ref, b2_ref, w3_ref, b3_ref, oT_ref):
    """One batch tile, feature-major.

    Computes oT = relu(W3 @ relu(W2 @ relu(W1 @ xT + b1) + b2) + b3) where every
    operand/intermediate is (features, TILE_B): the big batch axis sits on the
    lane dimension so every store is a full-width vst. Weights are PyTorch-layout
    (out_features, in_features); biases are (out_features, 1) columns that
    broadcast across lanes. Accumulation and elementwise math stay in f32.
    """
    xT = xT_ref[...].astype(jnp.float32)                                    # (2, TB)

    h1 = jnp.dot(w1_ref[...], xT, preferred_element_type=jnp.float32)      # (15, TB)
    h1 = jnp.maximum(h1 + b1_ref[...], 0.0)

    h2 = jnp.dot(w2_ref[...], h1, preferred_element_type=jnp.float32)      # (5, TB)
    h2 = jnp.maximum(h2 + b2_ref[...], 0.0)

    h3 = jnp.dot(w3_ref[...], h2, preferred_element_type=jnp.float32)      # (2, TB)
    h3 = jnp.maximum(h3 + b3_ref[...], 0.0)

    oT_ref[...] = h3.astype(oT_ref.dtype)


@functools.partial(jax.jit, static_argnames=("tile_b", "compute_dtype"))
def tiny_model_forward_pallas(x, params, tile_b=2048, compute_dtype=jnp.float32):
    """x: (B, 2) -> (B, 2). Pads B up to a multiple of the batch tile, runs the
    fused kernel over a 1-D batch grid, and slices the padding back off."""
    w1, b1, w2, b2, w3, b3 = params
    B = x.shape[0]

    # Lane dimension must be a multiple of 128; clamp the tile for small batches.
    tile_b = min(tile_b, _round_up(max(B, 1), 128))
    Bp = _round_up(B, tile_b)
    grid = (Bp // tile_b,)

    # One-time layout change in the wrapper: pad + transpose to feature-major,
    # optional bf16 cast of x / weights (biases stay f32; accumulation is f32).
    xT = jnp.pad(x, ((0, Bp - B), (0, 0))).T.astype(compute_dtype)          # (2, Bp)
    w1c, w2c, w3c = (w.astype(compute_dtype) for w in (w1, w2, w3))

    # Batch-tiled specs for x / out; full-block resident specs for params.
    x_spec = pl.BlockSpec((F_IN, tile_b), lambda i: (0, i))
    o_spec = pl.BlockSpec((F_OUT, tile_b), lambda i: (0, i))

    def resident(arr):
        return pl.BlockSpec(arr.shape, lambda i: (0, 0))

    itemsize = jnp.dtype(compute_dtype).itemsize
    param_bytes = sum(int(p.size) * p.dtype.itemsize for p in (w1c, b1, w2c, b2, w3c, b3))
    cost = pl.CostEstimate(
        flops=2 * Bp * (F_IN * F_H1 + F_H1 * F_H2 + F_H2 * F_OUT),
        transcendentals=0,
        bytes_accessed=Bp * F_IN * itemsize + Bp * F_OUT * 4 + param_bytes,
    )

    oT = pl.pallas_call(
        tiny_mlp_kernel,
        out_shape=jax.ShapeDtypeStruct((F_OUT, Bp), jnp.float32),
        grid=grid,
        in_specs=[
            x_spec,
            resident(w1c), resident(b1),
            resident(w2c), resident(b2),
            resident(w3c), resident(b3),
        ],
        out_specs=o_spec,
        compiler_params=pltpu.CompilerParams(
            dimension_semantics=("parallel",),   # megacore sharding on v7x
        ),
        cost_estimate=cost,
    )(xT, w1c, b1, w2c, b2, w3c, b3)

    return oT.T[:B]                                                         # (B, 2)


def tiny_model_forward(x, params):
    """Dispatcher: for tiny batches the pallas_call launch + DMA setup dwarfs the
    ~300 FLOPs of work, so let XLA fuse the plain path; use Pallas for large B."""
    if x.shape[0] < _PALLAS_MIN_BATCH:
        return reference_forward(x, params)
    return tiny_model_forward_pallas(x, params)


def init_params(key):
    """Mimics PyTorch nn.Linear init (uniform +/- 1/sqrt(fan_in)).
    Weights keep the PyTorch (out_features, in_features) layout; biases are
    (out_features, 1) columns for feature-major lane broadcast."""
    dims = [(F_IN, F_H1), (F_H1, F_H2), (F_H2, F_OUT)]
    params = []
    for fan_in, fan_out in dims:
        kw, kb, key = jax.random.split(key, 3)
        bound = 1.0 / jnp.sqrt(jnp.float32(fan_in))
        w = jax.random.uniform(kw, (fan_out, fan_in), jnp.float32, -bound, bound)
        b = jax.random.uniform(kb, (fan_out, 1), jnp.float32, -bound, bound)
        params += [w, b]
    return tuple(params)


def reference_forward(x, params):
    """Pure-JAX reference matching the PyTorch module (ReLU after every Linear,
    including the last one, exactly as in the TinyModel spec)."""
    w1, b1, w2, b2, w3, b3 = params
    h = jnp.maximum(x @ w1.astype(jnp.float32).T + b1.T, 0.0)
    h = jnp.maximum(h @ w2.astype(jnp.float32).T + b2.T, 0.0)
    h = jnp.maximum(h @ w3.astype(jnp.float32).T + b3.T, 0.0)
    return h


if __name__ == "__main__":
    key = jax.random.PRNGKey(0)
    key_x, key_p = jax.random.split(key)

    B = 8                                           # small demo batch
    x = jax.random.normal(key_x, (B, F_IN), jnp.float32)
    params = init_params(key_p)

    # Run the Pallas kernel directly (bypassing the small-batch dispatcher) so the
    # kernel itself is exercised; f32 end-to-end for an exact reference match.
    out = tiny_model_forward_pallas(x, params, compute_dtype=jnp.float32)
    out = jax.block_until_ready(out)

    ref = reference_forward(x, params)
    assert out.shape == (B, F_OUT)
    assert jnp.allclose(out, ref, atol=1e-5, rtol=1e-5), "mismatch vs reference"

    print("KERNEL_OK")
</pallas_src>

<mosaic_0001>
module attributes {stable_mosaic.version = 11 : i64} {
  func.func @tiny_mlp_kernel(%arg0: i32, %arg1: memref<2x128xf32, #tpu.memory_space<vmem>>, %arg2: memref<15x2xf32, #tpu.memory_space<vmem>>, %arg3: memref<15x1xf32, #tpu.memory_space<vmem>>, %arg4: memref<5x15xf32, #tpu.memory_space<vmem>>, %arg5: memref<5x1xf32, #tpu.memory_space<vmem>>, %arg6: memref<2x5xf32, #tpu.memory_space<vmem>>, %arg7: memref<2x1xf32, #tpu.memory_space<vmem>>, %arg8: memref<2x128xf32, #tpu.memory_space<vmem>>) attributes {dimension_semantics = [#tpu.dimension_semantics<parallel>], iteration_bounds = array<i64: 1>, scalar_prefetch = 0 : i64, scratch_operands = 0 : i64, tpu.core_type = #tpu.core_type<tc>, window_params = [{transform_indices = @transform_0, window_bounds = array<i64: 2, 128>}, {pipeline_mode = #tpu.pipeline_mode<synchronous>, transform_indices = @transform_1, window_bounds = array<i64: 15, 2>}, {pipeline_mode = #tpu.pipeline_mode<synchronous>, transform_indices = @transform_2, window_bounds = array<i64: 15, 1>}, {pipeline_mode = #tpu.pipeline_mode<synchronous>, transform_indices = @transform_3, window_bounds = array<i64: 5, 15>}, {pipeline_mode = #tpu.pipeline_mode<synchronous>, transform_indices = @transform_4, window_bounds = array<i64: 5, 1>}, {pipeline_mode = #tpu.pipeline_mode<synchronous>, transform_indices = @transform_5, window_bounds = array<i64: 2, 5>}, {pipeline_mode = #tpu.pipeline_mode<synchronous>, transform_indices = @transform_6, window_bounds = array<i64: 2, 1>}, {transform_indices = @transform_7, window_bounds = array<i64: 2, 128>}]} {
    %c0 = arith.constant 0 : index
    %c0_0 = arith.constant 0 : index
    %0 = vector.load %arg1[%c0, %c0_0] : memref<2x128xf32, #tpu.memory_space<vmem>>, vector<2x128xf32>
    %c0_1 = arith.constant 0 : index
    %c0_2 = arith.constant 0 : index
    %1 = vector.load %arg2[%c0_1, %c0_2] : memref<15x2xf32, #tpu.memory_space<vmem>>, vector<15x2xf32>
    %cst = arith.constant dense<0.000000e+00> : vector<15x128xf32>
    %2 = tpu.matmul %1, %0, %cst {dimension_numbers = #tpu.dot_dimension_numbers<[1], [0], [0], [1], [0, 0, 1, 1], [], []>} : vector<15x2xf32>, vector<2x128xf32>, vector<15x128xf32> -> vector<15x128xf32>
    %c0_3 = arith.constant 0 : index
    %c0_4 = arith.constant 0 : index
    %3 = vector.load %arg3[%c0_3, %c0_4] : memref<15x1xf32, #tpu.memory_space<vmem>>, vector<15x1xf32>
    %4 = vector.broadcast %3 : vector<15x1xf32> to vector<15x128xf32>
    %5 = arith.addf %2, %4 : vector<15x128xf32>
    %cst_5 = arith.constant 0.000000e+00 : f32
    %6 = vector.broadcast %cst_5 : f32 to vector<15x128xf32>
    %7 = arith.maximumf %5, %6 : vector<15x128xf32>
    %c0_6 = arith.constant 0 : index
    %c0_7 = arith.constant 0 : index
    %8 = vector.load %arg4[%c0_6, %c0_7] : memref<5x15xf32, #tpu.memory_space<vmem>>, vector<5x15xf32>
    %cst_8 = arith.constant dense<0.000000e+00> : vector<5x128xf32>
    %9 = tpu.matmul %8, %7, %cst_8 {dimension_numbers = #tpu.dot_dimension_numbers<[1], [0], [0], [1], [0, 0, 1, 1], [], []>} : vector<5x15xf32>, vector<15x128xf32>, vector<5x128xf32> -> vector<5x128xf32>
    %c0_9 = arith.constant 0 : index
    %c0_10 = arith.constant 0 : index
    %10 = vector.load %arg5[%c0_9, %c0_10] : memref<5x1xf32, #tpu.memory_space<vmem>>, vector<5x1xf32>
    %11 = vector.broadcast %10 : vector<5x1xf32> to vector<5x128xf32>
    %12 = arith.addf %9, %11 : vector<5x128xf32>
    %cst_11 = arith.constant 0.000000e+00 : f32
    %13 = vector.broadcast %cst_11 : f32 to vector<5x128xf32>
    %14 = arith.maximumf %12, %13 : vector<5x128xf32>
    %c0_12 = arith.constant 0 : index
    %c0_13 = arith.constant 0 : index
    %15 = vector.load %arg6[%c0_12, %c0_13] : memref<2x5xf32, #tpu.memory_space<vmem>>, vector<2x5xf32>
    %cst_14 = arith.constant dense<0.000000e+00> : vector<2x128xf32>
    %16 = tpu.matmul %15, %14, %cst_14 {dimension_numbers = #tpu.dot_dimension_numbers<[1], [0], [0], [1], [0, 0, 1, 1], [], []>} : vector<2x5xf32>, vector<5x128xf32>, vector<2x128xf32> -> vector<2x128xf32>
    %c0_15 = arith.constant 0 : index
    %c0_16 = arith.constant 0 : index
    %17 = vector.load %arg7[%c0_15, %c0_16] : memref<2x1xf32, #tpu.memory_space<vmem>>, vector<2x1xf32>
    %18 = vector.broadcast %17 : vector<2x1xf32> to vector<2x128xf32>
    %19 = arith.addf %16, %18 : vector<2x128xf32>
    %cst_17 = arith.constant 0.000000e+00 : f32
    %20 = vector.broadcast %cst_17 : f32 to vector<2x128xf32>
    %21 = arith.maximumf %19, %20 : vector<2x128xf32>
    %c0_18 = arith.constant 0 : index
    %c0_19 = arith.constant 0 : index
    %22 = vector.load %arg8[%c0_18, %c0_19] : memref<2x128xf32, #tpu.memory_space<vmem>>, vector<2x128xf32>
    tpu.vector_store %arg8[%c0_18, %c0_19], %21 {strides = array<i32>} : memref<2x128xf32, #tpu.memory_space<vmem>>, vector<2x128xf32>,
    return
  }
  func.func @transform_0(%arg0: i32) -> (i32, i32) {
    %c0_i32 = arith.constant 0 : i32
    %c0_i32_0 = arith.constant 0 : i32
    return %c0_i32, %arg0 : i32, i32
  }
  func.func @transform_1(%arg0: i32) -> (i32, i32) {
    %c0_i32 = arith.constant 0 : i32
    %c0_i32_0 = arith.constant 0 : i32
    %c0_i32_1 = arith.constant 0 : i32
    return %c0_i32, %c0_i32_0 : i32, i32
  }
  func.func @transform_2(%arg0: i32) -> (i32, i32) {
    %c0_i32 = arith.constant 0 : i32
    %c0_i32_0 = arith.constant 0 : i32
    %c0_i32_1 = arith.constant 0 : i32
    return %c0_i32, %c0_i32_0 : i32, i32
  }
  func.func @transform_3(%arg0: i32) -> (i32, i32) {
    %c0_i32 = arith.constant 0 : i32
    %c0_i32_0 = arith.constant 0 : i32
    %c0_i32_1 = arith.constant 0 : i32
    return %c0_i32, %c0_i32_0 : i32, i32
  }
  func.func @transform_4(%arg0: i32) -> (i32, i32) {
    %c0_i32 = arith.constant 0 : i32
    %c0_i32_0 = arith.constant 0 : i32
    %c0_i32_1 = arith.constant 0 : i32
    return %c0_i32, %c0_i32_0 : i32, i32
  }
  func.func @transform_5(%arg0: i32) -> (i32, i32) {
    %c0_i32 = arith.constant 0 : i32
    %c0_i32_0 = arith.constant 0 : i32
    %c0_i32_1 = arith.constant 0 : i32
    return %c0_i32, %c0_i32_0 : i32, i32
  }
  func.func @transform_6(%arg0: i32) -> (i32, i32) {
    %c0_i32 = arith.constant 0 : i32
    %c0_i32_0 = arith.constant 0 : i32
    %c0_i32_1 = arith.constant 0 : i32
    return %c0_i32, %c0_i32_0 : i32, i32
  }
  func.func @transform_7(%arg0: i32) -> (i32, i32) {
    %c0_i32 = arith.constant 0 : i32
    %c0_i32_0 = arith.constant 0 : i32
    return %c0_i32, %arg0 : i32, i32
  }
}

</mosaic_0001>

<llo_original>
// kernel: tiny_model_forward_pallas.1
$region0: #{tiny_model_forward_pallas.1}
  #allocation0 [shape = 'u32[]', space=smem, size = 0x4, offset = 0x4, fixed_abs, tag = 'smem constant byte address 0x4 - core index']
  #allocation1 [shape = 'u32[144,128]{1,0:T(1,128)}', space=vmem, size = 0x12000, scoped, tag = 'internal scratch']
  %s0 = inlined_call_operand.vmem [shape: f32[2,128], index: 0, kind: input, shape index: {}]
  %s1 = inlined_call_operand.vmem [shape: f32[15,2], index: 1, kind: input, shape index: {}]
  %s2 = inlined_call_operand.vmem [shape: f32[15,1], index: 2, kind: input, shape index: {}]
  %s3 = inlined_call_operand.vmem [shape: f32[5,15], index: 3, kind: input, shape index: {}]
  %s4 = inlined_call_operand.vmem [shape: f32[5,1], index: 4, kind: input, shape index: {}]
  %s5 = inlined_call_operand.vmem [shape: f32[2,5], index: 5, kind: input, shape index: {}]
  %s6 = inlined_call_operand.vmem [shape: f32[2,1], index: 6, kind: input, shape index: {}]
  %s7 = inlined_call_operand.hbm [shape: f32[2,128], index: 7, kind: output, shape index: {}]
  %s8 = sld [smem:[#allocation0]]
  $region38: #{tiny_model_forward_pallas.1} parent=0
    _
  %s10 = ssub.s32 1, %s8
  %s11 = scalar_select 0, %s10, %s8
  $region1: #{tiny_model_forward_pallas.1} parent=0
    #allocation2 [shape = 'u8[1024]{0}', space=vmem, size = 0x400, scoped, tag = 'output window, operand 0, single buffered']
    #allocation3 [shape = 's32[1]{0}', space=sflag, size = 0x4, scoped, tag = 'scoped memory for tiny_model_forward_pallas.1']
    %12 = vsyncpa [#allocation3], 0
    // Predicated region
    $region2: #{tiny_model_forward_pallas.1} parent=1 // pred_check
      _
    $region3: #{tiny_model_forward_pallas.1} parent=1 // pred_check_branch
      %14 = sbr.rel (0) target = $region5
    $region4: #{tiny_model_forward_pallas.1} parent=1 // pred_region
      _
    $region5: #{tiny_model_forward_pallas.1} parent=1 // pred_fallthru
      _
    // Predicated region
    $region6: #{tiny_model_forward_pallas.1} parent=1 // pred_check
      _
    $region7: #{tiny_model_forward_pallas.1} parent=1 // pred_check_branch
      %16 = sbr.rel (0) target = $region9
    $region8: #{tiny_model_forward_pallas.1} parent=1 // pred_region
      _
    $region9: #{tiny_model_forward_pallas.1} parent=1 // pred_fallthru
      _
    // Predicated region
    $region10: #{tiny_model_forward_pallas.1} parent=1 // pred_check
      _
    $region11: #{tiny_model_forward_pallas.1} parent=1 // pred_check_branch
      %18 = sbr.rel (0) target = $region13
    $region12: #{tiny_model_forward_pallas.1} parent=1 // pred_region
      _
    $region13: #{tiny_model_forward_pallas.1} parent=1 // pred_fallthru
      _
    // Predicated region
    $region14: #{tiny_model_forward_pallas.1} parent=1 // pred_check
      _
    $region15: #{tiny_model_forward_pallas.1} parent=1 // pred_check_branch
      %20 = sbr.rel (0) target = $region17
    $region16: #{tiny_model_forward_pallas.1} parent=1 // pred_region
      _
    $region17: #{tiny_model_forward_pallas.1} parent=1 // pred_fallthru
      _
    // Predicated region
    $region18: #{tiny_model_forward_pallas.1} parent=1 // pred_check
      _
    $region19: #{tiny_model_forward_pallas.1} parent=1 // pred_check_branch
      %22 = sbr.rel (0) target = $region21
    $region20: #{tiny_model_forward_pallas.1} parent=1 // pred_region
      _
    $region21: #{tiny_model_forward_pallas.1} parent=1 // pred_fallthru
      _
    // Predicated region
    $region22: #{tiny_model_forward_pallas.1} parent=1 // pred_check
      _
    $region23: #{tiny_model_forward_pallas.1} parent=1 // pred_check_branch
      %24 = sbr.rel (0) target = $region25
    $region24: #{tiny_model_forward_pallas.1} parent=1 // pred_region
      _
    $region25: #{tiny_model_forward_pallas.1} parent=1 // pred_fallthru
      _
    // Predicated region
    $region26: #{tiny_model_forward_pallas.1} parent=1 // pred_check
      _
    $region27: #{tiny_model_forward_pallas.1} parent=1 // pred_check_branch
      %26 = sbr.rel (0) target = $region29
    $region28: #{tiny_model_forward_pallas.1} parent=1 // pred_region
      _
    $region29: #{tiny_model_forward_pallas.1} parent=1 // pred_fallthru
      _
    %v27 = vld [vmem:[%s0] sm:$0x3]
    %v28 = vld [vmem:[%s1] sm:$0xff]
    %v29 = vld [vmem:[%s1 + $0x8] sm:$0x7f]
    %v30 = vld [vmem:[%s2] sm:$0xff]
    %v31 = vld [vmem:[%s2 + $0x8] sm:$0x7f]
    %33 = vset.pattern.permute.xlu0 0
    %34 = vperm.xlu0 %33, %v30
    %v35 = vpop.permute.xlu0 %34
    %38 = vset.pattern.permute.xlu0 0
    %39 = vperm.xlu0 %38, %v31
    %v40 = vpop.permute.xlu0 %39
    %vm42 = vcmask 15360
    %v44 = vsel %vm42, %v28, 0
    %v47 = vsel %vm42, %v29, 0
    %vm49 = vcmask 1041408
    %v51 = vsel %vm49, %v27, 0
    %53 = vmatprep.subr.mxu0 0.0
    %54 = vmatpush1.msra.mxu0 %v51
    %55 = vmatprep.subr.mxu0 0.0
    %56 = vmatpush1.msra.mxu0 0.0
    %57 = vmatprep.subr.mxu0 0.0
    %58 = vmatpush1.msra.mxu0 0.0
    %59 = vmatprep.subr.mxu0 0.0
    %60 = vmatpush1.msra.mxu0 0.0
    %61 = vmatprep.subr.mxu0 0.0
    %62 = vmatpush1.msra.mxu0 0.0
    %63 = vmatprep.subr.mxu0 0.0
    %64 = vmatpush1.msra.mxu0 0.0
    %65 = vmatprep.subr.mxu0 0.0
    %66 = vmatpush1.msra.mxu0 0.0
    %67 = vmatprep.subr.mxu0 0.0
    %68 = vmatpush1.msra.mxu0 0.0
    %69 = vmatprep.subr.mxu0 0.0
    %70 = vmatpush1.msra.mxu0 0.0
    %71 = vmatprep.subr.mxu0 0.0
    %72 = vmatpush1.msra.mxu0 0.0
    %73 = vmatprep.subr.mxu0 0.0
    %74 = vmatpush1.msra.mxu0 0.0
    %75 = vmatprep.subr.mxu0 0.0
    %76 = vmatpush1.msra.mxu0 0.0
    %77 = vmatprep.subr.mxu0 0.0
    %78 = vmatpush1.msra.mxu0 0.0
    %79 = vmatprep.subr.mxu0 0.0
    %80 = vmatpush1.msra.mxu0 0.0
    %81 = vmatprep.subr.mxu0 0.0
    %82 = vmatpush1.msra.mxu0 0.0
    %83 = vmatprep.subr.mxu0 0.0
    %84 = vmatpush1.msra.mxu0 0.0
    %85 = vmatprep.subr.mxu0 0.0
    %86 = vmatpush1.msra.mxu0 0.0
    %87 = vmatprep.subr.mxu0 0.0
    %88 = vmatpush1.msra.mxu0 0.0
    %89 = vmatprep.subr.mxu0 0.0
    %90 = vmatpush1.msra.mxu0 0.0
    %91 = vmatprep.subr.mxu0 0.0
    %92 = vmatpush1.msra.mxu0 0.0
    %93 = vmatprep.subr.mxu0 0.0
    %94 = vmatpush1.msra.mxu0 0.0
    %95 = vmatprep.subr.mxu0 0.0
    %96 = vmatpush1.msra.mxu0 0.0
    %97 = vmatprep.subr.mxu0 0.0
    %98 = vmatpush1.msra.mxu0 0.0
    %99 = vmatprep.subr.mxu0 0.0
    %100 = vmatpush1.msra.mxu0 0.0
    %101 = vmatprep.subr.mxu0 0.0
    %102 = vmatpush1.msra.mxu0 0.0
    %103 = vmatprep.subr.mxu0 0.0
    %104 = vmatpush1.msra.mxu0 0.0
    %105 = vmatprep.subr.mxu0 0.0
    %106 = vmatpush1.msra.mxu0 0.0
    %107 = vmatprep.subr.mxu0 0.0
    %108 = vmatpush1.msra.mxu0 0.0
    %109 = vmatprep.subr.mxu0 0.0
    %110 = vmatpush1.msra.mxu0 0.0
    %111 = vmatprep.subr.mxu0 0.0
    %112 = vmatpush1.msra.mxu0 0.0
    %113 = vmatprep.subr.mxu0 0.0
    %114 = vmatpush1.msra.mxu0 0.0
    %115 = vmatprep.subr.mxu0 0.0
    %116 = vmatpush1.msra.mxu0 0.0
    %117 = vmatprep.mubr.f32.mxu0 0.0
    %118 = vmatmul.mubr.f32.gmra.mrb[0].mxu0 %v44
    %v119 = vpop.f32.mrb[0].mxu0
    %v120 = vadd.f32 %v35, %v119
    %v121 = vpop.f32.mrb[0].mxu0
    %122 = vmatprep.mubr.f32.mxu0 0.0
    %123 = vmatmul.mubr.f32.gmra.mrb[0].mxu0 %v47
    %v124 = vpop.f32.mrb[0].mxu0
    %v125 = vadd.f32 %v40, %v124
    %v126 = vpop.f32.mrb[0].mxu0
    %127 = vdwg.mxu0
    %v128 = vmax.f32 %v120, 0.0
    %v129 = vmax.f32 %v125, 0.0
    %v130 = vld [vmem:[%s3] sm:$0x1f]
    %v131 = vld [vmem:[%s4] sm:$0x1f]
    %133 = vset.pattern.permute.xlu0 0
    %134 = vperm.xlu0 %133, %v131
    %v135 = vpop.permute.xlu0 %134
    %vm137 = vcmask 121856
    %v139 = vsel %vm137, %v130, 0
    %vm141 = vcmask 1046528
    %v143 = vsel %vm141, %v129, 0
    %145 = vmatprep.subr.mxu0 0.0
    %146 = vmatpush1.msra.mxu0 %v128
    %147 = vmatprep.subr.mxu0 0.0
    %148 = vmatpush1.msra.mxu0 %v143
    %149 = vmatprep.subr.mxu0 0.0
    %150 = vmatpush1.msra.mxu0 0.0
    %151 = vmatprep.subr.mxu0 0.0
    %152 = vmatpush1.msra.mxu0 0.0
    %153 = vmatprep.subr.mxu0 0.0
    %154 = vmatpush1.msra.mxu0 0.0
    %155 = vmatprep.subr.mxu0 0.0
    %156 = vmatpush1.msra.mxu0 0.0
    %157 = vmatprep.subr.mxu0 0.0
    %158 = vmatpush1.msra.mxu0 0.0
    %159 = vmatprep.subr.mxu0 0.0
    %160 = vmatpush1.msra.mxu0 0.0
    %161 = vmatprep.subr.mxu0 0.0
    %162 = vmatpush1.msra.mxu0 0.0
    %163 = vmatprep.subr.mxu0 0.0
    %164 = vmatpush1.msra.mxu0 0.0
    %165 = vmatprep.subr.mxu0 0.0
    %166 = vmatpush1.msra.mxu0 0.0
    %167 = vmatprep.subr.mxu0 0.0
    %168 = vmatpush1.msra.mxu0 0.0
    %169 = vmatprep.subr.mxu0 0.0
    %170 = vmatpush1.msra.mxu0 0.0
    %171 = vmatprep.subr.mxu0 0.0
    %172 = vmatpush1.msra.mxu0 0.0
    %173 = vmatprep.subr.mxu0 0.0
    %174 = vmatpush1.msra.mxu0 0.0
    %175 = vmatprep.subr.mxu0 0.0
    %176 = vmatpush1.msra.mxu0 0.0
    %177 = vmatprep.subr.mxu0 0.0
    %178 = vmatpush1.msra.mxu0 0.0
    %179 = vmatprep.subr.mxu0 0.0
    %180 = vmatpush1.msra.mxu0 0.0
    %181 = vmatprep.subr.mxu0 0.0
    %182 = vmatpush1.msra.mxu0 0.0
    %183 = vmatprep.subr.mxu0 0.0
    %184 = vmatpush1.msra.mxu0 0.0
    %185 = vmatprep.subr.mxu0 0.0
    %186 = vmatpush1.msra.mxu0 0.0
    %187 = vmatprep.subr.mxu0 0.0
    %188 = vmatpush1.msra.mxu0 0.0
    %189 = vmatprep.subr.mxu0 0.0
    %190 = vmatpush1.msra.mxu0 0.0
    %191 = vmatprep.subr.mxu0 0.0
    %192 = vmatpush1.msra.mxu0 0.0
    %193 = vmatprep.subr.mxu0 0.0
    %194 = vmatpush1.msra.mxu0 0.0
    %195 = vmatprep.subr.mxu0 0.0
    %196 = vmatpush1.msra.mxu0 0.0
    %197 = vmatprep.subr.mxu0 0.0
    %198 = vmatpush1.msra.mxu0 0.0
    %199 = vmatprep.subr.mxu0 0.0
    %200 = vmatpush1.msra.mxu0 0.0
    %201 = vmatprep.subr.mxu0 0.0
    %202 = vmatpush1.msra.mxu0 0.0
    %203 = vmatprep.subr.mxu0 0.0
    %204 = vmatpush1.msra.mxu0 0.0
    %205 = vmatprep.subr.mxu0 0.0
    %206 = vmatpush1.msra.mxu0 0.0
    %207 = vmatprep.subr.mxu0 0.0
    %208 = vmatpush1.msra.mxu0 0.0
    %209 = vmatprep.mubr.f32.mxu0 0.0
    %210 = vmatmul.mubr.f32.gmra.mrb[0].mxu0 %v139
    %v211 = vpop.f32.mrb[0].mxu0
    %v212 = vadd.f32 %v135, %v211
    %v213 = vpop.f32.mrb[0].mxu0
    %214 = vdwg.mxu0
    %v215 = vmax.f32 %v212, 0.0
    %v216 = vld [vmem:[%s5] sm:$0x3]
    %v217 = vld [vmem:[%s6] sm:$0x3]
    %219 = vset.pattern.permute.xlu0 0
    %220 = vperm.xlu0 %219, %v217
    %v221 = vpop.permute.xlu0 %220
    %vm223 = vcmask 39936
    %v225 = vsel %vm223, %v216, 0
    %vm227 = vcmask 1044480
    %v229 = vsel %vm227, %v215, 0
    %231 = vmatprep.subr.mxu0 0.0
    %232 = vmatpush1.msra.mxu0 %v229
    %233 = vmatprep.subr.mxu0 0.0
    %234 = vmatpush1.msra.mxu0 0.0
    %235 = vmatprep.subr.mxu0 0.0
    %236 = vmatpush1.msra.mxu0 0.0
    %237 = vmatprep.subr.mxu0 0.0
    %238 = vmatpush1.msra.mxu0 0.0
    %239 = vmatprep.subr.mxu0 0.0
    %240 = vmatpush1.msra.mxu0 0.0
    %241 = vmatprep.subr.mxu0 0.0
    %242 = vmatpush1.msra.mxu0 0.0
    %243 = vmatprep.subr.mxu0 0.0
    %244 = vmatpush1.msra.mxu0 0.0
    %245 = vmatprep.subr.mxu0 0.0
    %246 = vmatpush1.msra.mxu0 0.0
    %247 = vmatprep.subr.mxu0 0.0
    %248 = vmatpush1.msra.mxu0 0.0
    %249 = vmatprep.subr.mxu0 0.0
    %250 = vmatpush1.msra.mxu0 0.0
    %251 = vmatprep.subr.mxu0 0.0
    %252 = vmatpush1.msra.mxu0 0.0
    %253 = vmatprep.subr.mxu0 0.0
    %254 = vmatpush1.msra.mxu0 0.0
    %255 = vmatprep.subr.mxu0 0.0
    %256 = vmatpush1.msra.mxu0 0.0
    %257 = vmatprep.subr.mxu0 0.0
    %258 = vmatpush1.msra.mxu0 0.0
    %259 = vmatprep.subr.mxu0 0.0
    %260 = vmatpush1.msra.mxu0 0.0
    %261 = vmatprep.subr.mxu0 0.0
    %262 = vmatpush1.msra.mxu0 0.0
    %263 = vmatprep.subr.mxu0 0.0
    %264 = vmatpush1.msra.mxu0 0.0
    %265 = vmatprep.subr.mxu0 0.0
    %266 = vmatpush1.msra.mxu0 0.0
    %267 = vmatprep.subr.mxu0 0.0
    %268 = vmatpush1.msra.mxu0 0.0
    %269 = vmatprep.subr.mxu0 0.0
    %270 = vmatpush1.msra.mxu0 0.0
    %271 = vmatprep.subr.mxu0 0.0
    %272 = vmatpush1.msra.mxu0 0.0
    %273 = vmatprep.subr.mxu0 0.0
    %274 = vmatpush1.msra.mxu0 0.0
    %275 = vmatprep.subr.mxu0 0.0
    %276 = vmatpush1.msra.mxu0 0.0
    %277 = vmatprep.subr.mxu0 0.0
    %278 = vmatpush1.msra.mxu0 0.0
    %279 = vmatprep.subr.mxu0 0.0
    %280 = vmatpush1.msra.mxu0 0.0
    %281 = vmatprep.subr.mxu0 0.0
    %282 = vmatpush1.msra.mxu0 0.0
    %283 = vmatprep.subr.mxu0 0.0
    %284 = vmatpush1.msra.mxu0 0.0
    %285 = vmatprep.subr.mxu0 0.0
    %286 = vmatpush1.msra.mxu0 0.0
    %287 = vmatprep.subr.mxu0 0.0
    %288 = vmatpush1.msra.mxu0 0.0
    %289 = vmatprep.subr.mxu0 0.0
    %290 = vmatpush1.msra.mxu0 0.0
    %291 = vmatprep.subr.mxu0 0.0
    %292 = vmatpush1.msra.mxu0 0.0
    %293 = vmatprep.subr.mxu0 0.0
    %294 = vmatpush1.msra.mxu0 0.0
    %295 = vmatprep.mubr.f32.mxu0 0.0
    %296 = vmatmul.mubr.f32.gmra.mrb[0].mxu0 %v225
    %v297 = vpop.f32.mrb[0].mxu0
    %v298 = vadd.f32 %v221, %v297
    %v299 = vpop.f32.mrb[0].mxu0
    %300 = vdwg.mxu0
    %v301 = vmax.f32 %v298, 0.0
    %302 = vst [vmem:[#allocation2] sm:$0x3] %v301
    // Predicated region
    $region30: #{tiny_model_forward_pallas.1} parent=1 // pred_check
      _
    $region31: #{tiny_model_forward_pallas.1} parent=1 // pred_check_branch
      %304 = sbr.rel (0) target = $region33
    $region32: #{tiny_model_forward_pallas.1} parent=1 // pred_region
      %s306 = ssub.s32 32, 32
      %307 = vsyncadd [#allocation3], %s306
      %s309 = sshll.u32 [#allocation2], 4
      %s310 = int_to_ptr.vmem [resolvable:$true] %s309
      %312 = dma.vmem_to_hbm [thread:$0]  %s310, 32, %s7, [#allocation3]
    $region33: #{tiny_model_forward_pallas.1} parent=1 // pred_fallthru
      _
    // Predicated region
    $region34: #{tiny_model_forward_pallas.1} parent=1 // pred_check
      _
    $region35: #{tiny_model_forward_pallas.1} parent=1 // pred_check_branch
      %314 = sbr.rel (0) target = $region37
    $region36: #{tiny_model_forward_pallas.1} parent=1 // pred_region
      %315 = dma.done [#allocation3], 32
    $region37: #{tiny_model_forward_pallas.1} parent=1 // pred_fallthru
      _
    %316 = vsyncpa [#allocation3], 1

</llo_original>
